<compile_context>
chip_gen: v6e
topology: v6e:2x2x1
jax: 0.10.0
libtpu: 0.0.40
codegen_flags: <defaults>
</compile_context>

<pallas_src>
import jax
import jax.numpy as jnp
from jax.experimental import pallas as pl
from jax.experimental.pallas import tpu as pltpu

CIN = 3
COUT = 8
LANE = 128
MAX_TS = 2048  # spatial lanes per block (multiple of 128); ~100 KB double-buffered VMEM


def _round_up(x, m):
    return (x + m - 1) // m * m


def conv1x1_elementwise_kernel(x_ref, w_ref, b_ref, o_ref):
    # x_ref: (1, CIN, TS)   input slab, spatial in lanes
    # w_ref: (COUT, CIN)    conv weight already scaled by 1/2
    # b_ref: (COUT, 1)      bias/2 - 2.1 (bias, div and subtract folded)
    # o_ref: (1, COUT, TS)  output slab (channel-major == NCHW)
    x = x_ref[0]            # (CIN, TS)
    w = w_ref[...]          # (COUT, CIN)

    # 1x1 conv as VPU broadcast FMAs: (COUT,1) x (1,TS) -> (COUT,TS); no MXU involved.
    y = (w[:, 0:1] * x[0:1, :]
         + w[:, 1:2] * x[1:2, :]
         + w[:, 2:3] * x[2:3, :]
         + b_ref[...])

    y = jnp.abs(y)                                  # |conv/2 - 2.1|
    y = jnp.minimum(jnp.maximum(y, 0.1), 0.9)       # clamp(min=0.1), clamp(max=0.9)
    o_ref[0] = y.astype(o_ref.dtype)                # single full-width (COUT, TS) store


@jax.jit
def model_forward(x_nchw, weight, bias):
    """x_nchw: (N, 3, H, W) f32; weight: (COUT, CIN); bias: (COUT,).
    Returns (N, COUT, H+2, W+2), matching the PyTorch module output."""
    n, c, h, w = x_nchw.shape
    assert c == CIN

    hp, wp = h + 2, w + 2
    s = hp * wp

    # Zero spatial padding of 1: with a 1x1 kernel the padded border outputs are exactly
    # `bias`, reproduced here by 0 * w + b.  NCHW is already channel-major, so no transpose.
    x_pad = jnp.pad(x_nchw, ((0, 0), (0, 0), (1, 1), (1, 1)))
    x_flat = x_pad.reshape(n, CIN, s)                       # contiguous -> free reshape

    # Fold bias, the /2 and the -2.1 into the 24 weights / 8 biases on host.
    w_eff = weight.astype(jnp.float32) * 0.5                 # (COUT, CIN)
    b_eff = (bias.astype(jnp.float32) * 0.5 - 2.1).reshape(COUT, 1)

    ts = min(MAX_TS, _round_up(s, LANE))                     # lane-dense, 128-aligned tile
    grid = (n, pl.cdiv(s, ts))                               # uneven last tile is masked

    out_flat = pl.pallas_call(
        conv1x1_elementwise_kernel,
        out_shape=jax.ShapeDtypeStruct((n, COUT, s), jnp.float32),
        grid_spec=pltpu.PrefetchScalarGridSpec(
            num_scalar_prefetch=0,
            grid=grid,
            in_specs=[
                pl.BlockSpec((1, CIN, ts), lambda i, j: (i, 0, j)),
                pl.BlockSpec((COUT, CIN), lambda i, j: (0, 0)),
                pl.BlockSpec((COUT, 1), lambda i, j: (0, 0)),
            ],
            out_specs=pl.BlockSpec((1, COUT, ts), lambda i, j: (i, 0, j)),
        ),
        compiler_params=pltpu.CompilerParams(
            dimension_semantics=("parallel", "parallel")),
    )(x_flat, w_eff, b_eff)

    # Output is already NCHW channel-major; reshape of contiguous data is free.
    return out_flat.reshape(n, COUT, hp, wp)


def reference_forward(x_nchw, weight, bias):
    # Pure-JAX reference for sanity checking (mirrors the PyTorch forward).
    x_pad = jnp.pad(x_nchw, ((0, 0), (0, 0), (1, 1), (1, 1)))
    y = jnp.einsum("nchw,oc->nohw", x_pad, weight) + bias[None, :, None, None]
    y = jnp.abs(y / 2.0 - 2.1)
    return jnp.clip(y, 0.1, 0.9)


if __name__ == "__main__":
    key = jax.random.PRNGKey(0)
    kx, kw, kb = jax.random.split(key, 3)

    # Small shapes consistent with the module (Conv2d expects 3 input channels).
    N, H, W = 2, 16, 16
    x = jax.random.normal(kx, (N, CIN, H, W), dtype=jnp.float32)

    # Deterministic parameter init (Conv2d(3, 8, 1) => weight (8,3,1,1) ~ (8,3), bias (8,))
    fan_in = CIN * 1 * 1
    bound = 1.0 / (fan_in ** 0.5)
    weight = jax.random.uniform(kw, (COUT, CIN), jnp.float32, -bound, bound)
    bias = jax.random.uniform(kb, (COUT,), jnp.float32, -bound, bound)

    out = jax.block_until_ready(model_forward(x, weight, bias))
    ref = reference_forward(x, weight, bias)

    assert out.shape == (N, COUT, H + 2, W + 2), out.shape
    assert jnp.allclose(out, ref, atol=1e-5, rtol=1e-5)

    print("KERNEL_OK")
</pallas_src>

<mosaic_0001>
module attributes {stable_mosaic.version = 11 : i64} {
  func.func @conv1x1_elementwise_kernel(%arg0: i32, %arg1: i32, %arg2: memref<1x3x384xf32, #tpu.memory_space<vmem>>, %arg3: memref<8x3xf32, #tpu.memory_space<vmem>>, %arg4: memref<8x1xf32, #tpu.memory_space<vmem>>, %arg5: memref<1x8x384xf32, #tpu.memory_space<vmem>>) attributes {dimension_semantics = [#tpu.dimension_semantics<parallel>, #tpu.dimension_semantics<parallel>], iteration_bounds = array<i64: 2, 1>, scalar_prefetch = 0 : i64, scratch_operands = 0 : i64, tpu.core_type = #tpu.core_type<tc>, window_params = [{transform_indices = @transform_0, window_bounds = array<i64: 1, 3, 384>}, {pipeline_mode = #tpu.pipeline_mode<synchronous>, transform_indices = @transform_1, window_bounds = array<i64: 8, 3>}, {pipeline_mode = #tpu.pipeline_mode<synchronous>, transform_indices = @transform_2, window_bounds = array<i64: 8, 1>}, {transform_indices = @transform_3, window_bounds = array<i64: 1, 8, 384>}]} {
    %c0 = arith.constant 0 : index
    %c0_0 = arith.constant 0 : index
    %c0_1 = arith.constant 0 : index
    %0 = vector.load %arg2[%c0, %c0_0, %c0_1] : memref<1x3x384xf32, #tpu.memory_space<vmem>>, vector<1x3x384xf32>
    %1 = vector.shape_cast %0 : vector<1x3x384xf32> to vector<3x384xf32>
    %c0_2 = arith.constant 0 : index
    %c0_3 = arith.constant 0 : index
    %2 = vector.load %arg3[%c0_2, %c0_3] : memref<8x3xf32, #tpu.memory_space<vmem>>, vector<8x3xf32>
    %3 = vector.extract_strided_slice %2 {offsets = [0, 0], sizes = [8, 1], strides = [1, 1]} : vector<8x3xf32> to vector<8x1xf32>
    %4 = vector.extract_strided_slice %1 {offsets = [0, 0], sizes = [1, 384], strides = [1, 1]} : vector<3x384xf32> to vector<1x384xf32>
    %5 = vector.broadcast %3 : vector<8x1xf32> to vector<8x384xf32>
    %6 = vector.broadcast %4 : vector<1x384xf32> to vector<8x384xf32>
    %7 = arith.mulf %5, %6 : vector<8x384xf32>
    %8 = vector.extract_strided_slice %2 {offsets = [0, 1], sizes = [8, 1], strides = [1, 1]} : vector<8x3xf32> to vector<8x1xf32>
    %9 = vector.extract_strided_slice %1 {offsets = [1, 0], sizes = [1, 384], strides = [1, 1]} : vector<3x384xf32> to vector<1x384xf32>
    %10 = vector.broadcast %8 : vector<8x1xf32> to vector<8x384xf32>
    %11 = vector.broadcast %9 : vector<1x384xf32> to vector<8x384xf32>
    %12 = arith.mulf %10, %11 : vector<8x384xf32>
    %13 = arith.addf %7, %12 : vector<8x384xf32>
    %14 = vector.extract_strided_slice %2 {offsets = [0, 2], sizes = [8, 1], strides = [1, 1]} : vector<8x3xf32> to vector<8x1xf32>
    %15 = vector.extract_strided_slice %1 {offsets = [2, 0], sizes = [1, 384], strides = [1, 1]} : vector<3x384xf32> to vector<1x384xf32>
    %16 = vector.broadcast %14 : vector<8x1xf32> to vector<8x384xf32>
    %17 = vector.broadcast %15 : vector<1x384xf32> to vector<8x384xf32>
    %18 = arith.mulf %16, %17 : vector<8x384xf32>
    %19 = arith.addf %13, %18 : vector<8x384xf32>
    %c0_4 = arith.constant 0 : index
    %c0_5 = arith.constant 0 : index
    %20 = vector.load %arg4[%c0_4, %c0_5] : memref<8x1xf32, #tpu.memory_space<vmem>>, vector<8x1xf32>
    %21 = vector.broadcast %20 : vector<8x1xf32> to vector<8x384xf32>
    %22 = arith.addf %19, %21 : vector<8x384xf32>
    %23 = math.absf %22 : vector<8x384xf32>
    %cst = arith.constant 1.000000e-01 : f32
    %24 = vector.broadcast %cst : f32 to vector<8x384xf32>
    %25 = arith.maximumf %23, %24 : vector<8x384xf32>
    %cst_6 = arith.constant 0.899999976 : f32
    %26 = vector.broadcast %cst_6 : f32 to vector<8x384xf32>
    %27 = arith.minimumf %25, %26 : vector<8x384xf32>
    %c0_7 = arith.constant 0 : index
    %c0_8 = arith.constant 0 : index
    %c0_9 = arith.constant 0 : index
    %28 = vector.load %arg5[%c0_7, %c0_8, %c0_9] : memref<1x8x384xf32, #tpu.memory_space<vmem>>, vector<1x8x384xf32>
    %29 = vector.shape_cast %28 : vector<1x8x384xf32> to vector<8x384xf32>
    %30 = vector.shape_cast %27 : vector<8x384xf32> to vector<1x8x384xf32>
    tpu.vector_store %arg5[%c0_7, %c0_8, %c0_9], %30 {strides = array<i32>} : memref<1x8x384xf32, #tpu.memory_space<vmem>>, vector<1x8x384xf32>,
    return
  }
  func.func @transform_0(%arg0: i32, %arg1: i32) -> (i32, i32, i32) {
    %c0_i32 = arith.constant 0 : i32
    %c0_i32_0 = arith.constant 0 : i32
    return %arg0, %c0_i32, %arg1 : i32, i32, i32
  }
  func.func @transform_1(%arg0: i32, %arg1: i32) -> (i32, i32) {
    %c0_i32 = arith.constant 0 : i32
    %c0_i32_0 = arith.constant 0 : i32
    %c0_i32_1 = arith.constant 0 : i32
    return %c0_i32, %c0_i32_0 : i32, i32
  }
  func.func @transform_2(%arg0: i32, %arg1: i32) -> (i32, i32) {
    %c0_i32 = arith.constant 0 : i32
    %c0_i32_0 = arith.constant 0 : i32
    %c0_i32_1 = arith.constant 0 : i32
    return %c0_i32, %c0_i32_0 : i32, i32
  }
  func.func @transform_3(%arg0: i32, %arg1: i32) -> (i32, i32, i32) {
    %c0_i32 = arith.constant 0 : i32
    %c0_i32_0 = arith.constant 0 : i32
    return %arg0, %c0_i32, %arg1 : i32, i32, i32
  }
}

</mosaic_0001>

<llo_original>
// kernel: model_forward.1
$region0: #{model_forward.1}
  #allocation0 [shape = 'u32[]', space=smem, size = 0x4, offset = 0x4, fixed_abs, tag = 'smem constant byte address 0x4 - core index']
  #allocation1 [shape = 'u32[144,128]{1,0:T(1,128)}', space=vmem, size = 0x12000, scoped, tag = 'internal scratch']
  %s0 = inlined_call_operand.vmem [shape: f32[2,3,324], index: 0, kind: input, shape index: {}]
  %s1 = inlined_call_operand.vmem [shape: f32[8,3], index: 1, kind: input, shape index: {}]
  %s2 = inlined_call_operand.vmem [shape: f32[8,1], index: 2, kind: input, shape index: {}]
  %s3 = inlined_call_operand.vmem [shape: f32[2,8,324], index: 3, kind: output, shape index: {}]
  %s4 = sld [smem:[#allocation0]]
  $region45: #{model_forward.1} parent=0
    _
  %s6 = ssub.s32 1, %s4
  %s7 = scalar_select 0, %s6, %s4
  loop: start=0, step=1, limit=4
  $region2: #{model_forward.1} parent=0 // loop_pre_header
    _
  $region3: #{model_forward.1} parent=0 // loop_header
    %s9 = sphi 0, %s13
    %p10 = scmp.ge.s32.totalorder %s9, 4
    %s16 = sphi 0, %s28
    %s17 = sphi 0, %s24
    %s18 = sphi 0, %s16
    %s19 = sphi 0, %s17
    %s20 = sphi 0, %s18
    %s21 = sphi 0, %s19
    %s33 = sphi 0, %s35
    %s36 = sphi 0, %s33
    %s37 = sphi 0, %s36
    %s53 = sphi 0, %s37
    %s57 = sphi 0, %s57
    %s59 = sphi 0, %s57
    %s60 = sphi 0, %s59
    %s74 = sphi 0, %s60
    %s78 = sphi 0, %s78
    %s80 = sphi 0, %s78
    %s81 = sphi 0, %s80
    %s95 = sphi 0, %s81
    %s103 = sphi 0, %s105
    %s106 = sphi 0, %s103
    %s107 = sphi 0, %s106
    %s123 = sphi 0, %s107
  $region4: #{model_forward.1} parent=0 // loop_header_branch
    %12 = sbr.rel (%p10) target = $region8
  $region5: #{model_forward.1} parent=0 // loop_body
    %s14 = ssub.s32 %s9, 1
    %s15 = ssub.s32 %s9, 2
    %s22 = sadd.s32 1, %s17
    %p23 = scmp.ge.s32.totalorder %s22, 1
    %s24 = scalar_select %p23, 0, %s22
    %s25 = sadd.s32 1, %s16
    %s26 = scalar_select %p23, %s25, %s16
    %p27 = scmp.ge.s32.totalorder %s26, 2
    %s28 = scalar_select %p27, 0, %s26
    %s29 = ssub.s32 %s16, %s28
    %s30 = ssub.s32 %s17, %s24
    %s31 = sor.u32 %s29, %s30
    %p32 = scmp.eq.s32.totalorder %s31, 0
    %s34 = sadd.s32 %s33, 1
    %s35 = scalar_select %p32, %s33, %s34
    %p38 = pneg %p32
    %p39 = scmp.eq.s32.totalorder %s9, 1
    %p40 = por %p38, %p39
    %p41 = scmp.ne.s32.totalorder %s33, %s36
    %p42 = scmp.eq.s32.totalorder %s9, 0
    %p43 = por %p41, %p42
    %p44 = scmp.ne.s32.totalorder %s33, %s36
    %p45 = scmp.eq.s32.totalorder %s14, 1
    %p46 = por %p44, %p45
    %p47 = scmp.ne.s32.totalorder %s36, %s37
    %p48 = scmp.eq.s32.totalorder %s14, 0
    %p49 = por %p47, %p48
    %p50 = scmp.ne.s32.totalorder %s36, %s37
    %p51 = scmp.eq.s32.totalorder %s15, 1
    %p52 = por %p50, %p51
    %p54 = scmp.ne.s32.totalorder %s37, %s53
    %p55 = scmp.eq.s32.totalorder %s15, 0
    %p56 = por %p54, %p55
    %s58 = sadd.s32 %s57, 1
    %p61 = scmp.eq.s32.totalorder %s9, 1
    %p62 = scmp.ne.s32.totalorder %s57, %s59
    %p63 = scmp.eq.s32.totalorder %s9, 0
    %p64 = por %p62, %p63
    %p65 = scmp.ne.s32.totalorder %s57, %s59
    %p66 = scmp.eq.s32.totalorder %s14, 1
    %p67 = por %p65, %p66
    %p68 = scmp.ne.s32.totalorder %s59, %s60
    %p69 = scmp.eq.s32.totalorder %s14, 0
    %p70 = por %p68, %p69
    %p71 = scmp.ne.s32.totalorder %s59, %s60
    %p72 = scmp.eq.s32.totalorder %s15, 1
    %p73 = por %p71, %p72
    %p75 = scmp.ne.s32.totalorder %s60, %s74
    %p76 = scmp.eq.s32.totalorder %s15, 0
    %p77 = por %p75, %p76
    %s79 = sadd.s32 %s78, 1
    %p82 = scmp.eq.s32.totalorder %s9, 1
    %p83 = scmp.ne.s32.totalorder %s78, %s80
    %p84 = scmp.eq.s32.totalorder %s9, 0
    %p85 = por %p83, %p84
    %p86 = scmp.ne.s32.totalorder %s78, %s80
    %p87 = scmp.eq.s32.totalorder %s14, 1
    %p88 = por %p86, %p87
    %p89 = scmp.ne.s32.totalorder %s80, %s81
    %p90 = scmp.eq.s32.totalorder %s14, 0
    %p91 = por %p89, %p90
    %p92 = scmp.ne.s32.totalorder %s80, %s81
    %p93 = scmp.eq.s32.totalorder %s15, 1
    %p94 = por %p92, %p93
    %p96 = scmp.ne.s32.totalorder %s81, %s95
    %p97 = scmp.eq.s32.totalorder %s15, 0
    %p98 = por %p96, %p97
    %s99 = ssub.s32 %s16, %s28
    %s100 = ssub.s32 %s17, %s24
    %s101 = sor.u32 %s99, %s100
    %p102 = scmp.eq.s32.totalorder %s101, 0
    %s104 = sadd.s32 %s103, 1
    %s105 = scalar_select %p102, %s103, %s104
    %p108 = pneg %p102
    %p109 = scmp.eq.s32.totalorder %s9, 1
    %p110 = por %p108, %p109
    %p111 = scmp.ne.s32.totalorder %s103, %s106
    %p112 = scmp.eq.s32.totalorder %s9, 0
    %p113 = por %p111, %p112
    %p114 = scmp.ne.s32.totalorder %s103, %s106
    %p115 = scmp.eq.s32.totalorder %s14, 1
    %p116 = por %p114, %p115
    %p117 = scmp.ne.s32.totalorder %s106, %s107
    %p118 = scmp.eq.s32.totalorder %s14, 0
    %p119 = por %p117, %p118
    %p120 = scmp.ne.s32.totalorder %s106, %s107
    %p121 = scmp.eq.s32.totalorder %s15, 1
    %p122 = por %p120, %p121
    %p124 = scmp.ne.s32.totalorder %s107, %s123
    %p125 = scmp.eq.s32.totalorder %s15, 0
    %p126 = por %p124, %p125
    %p127 = scmp.le.s32.totalorder 1, %s9
    %p128 = scmp.lt.s32.totalorder %s9, 3
    %p129 = pnand %p127, %p128
    %p130 = pneg %p129
    // Predicated region
    $region9: #{model_forward.1} parent=5 // pred_check
      _
    $region10: #{model_forward.1} parent=5 // pred_check_branch
      %132 = sbr.rel (%p129) target = $region12
    $region11: #{model_forward.1} parent=5 // pred_region
      %s133 = ssub.s32 %s9, 1
      // Predicated region
      $region13: #{model_forward.1} parent=11 // pred_check
        %p134 = pneg %p70
      $region14: #{model_forward.1} parent=11 // pred_check_branch
        %136 = sbr.rel (%p134) target = $region16
      $region15: #{model_forward.1} parent=11 // pred_region
        _
      $region16: #{model_forward.1} parent=11 // pred_fallthru
        _
      // Predicated region
      $region17: #{model_forward.1} parent=11 // pred_check
        %p137 = pneg %p91
      $region18: #{model_forward.1} parent=11 // pred_check_branch
        %139 = sbr.rel (%p137) target = $region20
      $region19: #{model_forward.1} parent=11 // pred_region
        _
      $region20: #{model_forward.1} parent=11 // pred_fallthru
        _
    $region12: #{model_forward.1} parent=5 // pred_fallthru
      _
    %p140 = scmp.lt.s32.totalorder %s9, 2
    // Predicated region
    $region21: #{model_forward.1} parent=5 // pred_check
      %p141 = pneg %p140
    $region22: #{model_forward.1} parent=5 // pred_check_branch
      %143 = sbr.rel (%p141) target = $region24
    $region23: #{model_forward.1} parent=5 // pred_region
      // Predicated region
      $region25: #{model_forward.1} parent=23 // pred_check
        %p144 = pneg %p43
      $region26: #{model_forward.1} parent=23 // pred_check_branch
        %146 = sbr.rel (%p144) target = $region28
      $region27: #{model_forward.1} parent=23 // pred_region
        %s147 = smul.u32 3, %s17
        %p148 = scmp.lt.s32.totalorder %s16, 1
        %s149 = scalar_select %p148, %s16, 1
        %p150 = scmp.lt.s32.totalorder %s147, 2
        %s151 = scalar_select %p150, %s147, 2
        %s152 = smul.addr %s149, 3
        %s153 = sadd.s32 %s151, %s152
        %s154 = smul.addr %s153, 4
        %s155 = scalar_lea.vmem %s0, %s154
        %s156 = smul.u32 3, %s17
      $region28: #{model_forward.1} parent=23 // pred_fallthru
        _
    $region24: #{model_forward.1} parent=5 // pred_fallthru
      _
    %p157 = scmp.le.s32.totalorder 1, %s9
    %p158 = scmp.lt.s32.totalorder %s9, 3
    %p159 = pnand %p157, %p158
    %p160 = pneg %p159
    // Predicated region
    $region29: #{model_forward.1} parent=5 // pred_check
      _
    $region30: #{model_forward.1} parent=5 // pred_check_branch
      %162 = sbr.rel (%p159) target = $region32
    $region31: #{model_forward.1} parent=5 // pred_region
      %s163 = ssub.s32 %s9, 1
      %s164 = smul.u32 3, %s19
      %p165 = scmp.lt.s32.totalorder %s18, 1
      %s166 = scalar_select %p165, %s18, 1
      %p167 = scmp.lt.s32.totalorder %s164, 2
      %s168 = scalar_select %p167, %s164, 2
      %s169 = smul.addr %s166, 3
      %s170 = sadd.s32 %s168, %s169
      %s171 = smul.addr %s170, 4
      %s172 = scalar_lea.vmem %s0, %s171
      %p173 = pneg %p49
      %p174 = pneg %p46
      %p175 = pneg %p70
      %p176 = pneg %p67
      %p177 = pneg %p91
      %p178 = pneg %p88
      %p179 = pneg %p119
      %p180 = pneg %p116
      %s181 = smul.u32 3, %s19
      %p182 = scmp.lt.s32.totalorder %s18, 1
      %s183 = scalar_select %p182, %s18, 1
      %p184 = scmp.lt.s32.totalorder %s181, 2
      %s185 = scalar_select %p184, %s181, 2
      %s186 = smul.addr %s183, 3
      %s187 = sadd.s32 %s185, %s186
      %s188 = smul.addr %s187, 8
      %s189 = scalar_lea.vmem %s3, %s188
      %s190 = smul.u32 3, %s19
      %p191 = scmp.lt.s32.totalorder %s18, 1
      %s192 = scalar_select %p191, %s18, 1
      %p193 = scmp.lt.s32.totalorder %s190, 2
      %s194 = scalar_select %p193, %s190, 2
      %s195 = smul.addr %s192, 3
      %s196 = sadd.s32 %s194, %s195
      %s197 = smul.addr %s196, 4
      %s198 = scalar_lea.vmem %s0, %s197
      %s199 = smul.u32 3, %s19
      %s200 = smul.u32 3, %s19
      %p201 = scmp.lt.s32.totalorder %s18, 1
      %s202 = scalar_select %p201, %s18, 1
      %p203 = scmp.lt.s32.totalorder %s200, 2
      %s204 = scalar_select %p203, %s200, 2
      %s205 = smul.addr %s202, 3
      %s206 = sadd.s32 %s204, %s205
      %s207 = smul.addr %s206, 8
      %s208 = scalar_lea.vmem %s3, %s207
      %s209 = smul.u32 3, %s19
      %v210 = vld [vmem:[%s198] sm:$0x77]
      %v211 = vld [vmem:[%s198 + $0x8] sm:$0x7]
      %v212 = vld [vmem:[%s1] sm:$0xff]
      %214 = vset.pattern.permute.xlu0 0
      %215 = vperm.xlu0 %214, %v212
      %v216 = vpop.permute.xlu0 %215
      %v220 = vlaneseq
      %v221 = vshrl.u32 %v220, 7
      %v222 = vsub.s32 0, %v221
      %v223 = vrot.slane %v210, %v222
      %v224 = vlaneseq
      %v225 = vshrl.u32 %v224, 7
      %v226 = vsub.s32 4, %v225
      %v227 = vrot.slane %v210, %v226
      %v228 = vlaneseq
      %v229 = vshrl.u32 %v228, 7
      %v230 = vsub.s32 0, %v229
      %v231 = vrot.slane %v211, %v230
      %v235 = vlaneseq
      %v236 = vshrl.u32 %v235, 7
      %v237 = vsub.s32 0, %v236
      %v238 = vrot.slane %v223, %v237
      %v239 = vlaneseq
      %v240 = vshrl.u32 %v239, 7
      %v241 = vsub.s32 0, %v240
      %v242 = vrot.slane %v227, %v241
      %v243 = vlaneseq
      %v244 = vshrl.u32 %v243, 7
      %v245 = vsub.s32 0, %v244
      %v246 = vrot.slane %v231, %v245
      %v247 = vmul.f32 %v216, %v238
      %v248 = vmul.f32 %v216, %v242
      %v249 = vmul.f32 %v216, %v246
      %250 = vset.pattern.permute.xlu0 1
      %251 = vperm.xlu0 %250, %v212
      %v252 = vpop.permute.xlu0 %251
      %v254 = vlaneseq
      %v255 = vshrl.u32 %v254, 7
      %v256 = vsub.s32 1, %v255
      %v257 = vrot.slane %v210, %v256
      %v258 = vlaneseq
      %v259 = vshrl.u32 %v258, 7
      %v260 = vsub.s32 5, %v259
      %v261 = vrot.slane %v210, %v260
      %v262 = vlaneseq
      %v263 = vshrl.u32 %v262, 7
      %v264 = vsub.s32 1, %v263
      %v265 = vrot.slane %v211, %v264
      %v269 = vlaneseq
      %v270 = vshrl.u32 %v269, 7
      %v271 = vsub.s32 1, %v270
      %v272 = vrot.slane %v257, %v271
      %v273 = vlaneseq
      %v274 = vshrl.u32 %v273, 7
      %v275 = vsub.s32 1, %v274
      %v276 = vrot.slane %v261, %v275
      %v277 = vlaneseq
      %v278 = vshrl.u32 %v277, 7
      %v279 = vsub.s32 1, %v278
      %v280 = vrot.slane %v265, %v279
      %v281 = vmul.f32 %v252, %v272
      %v282 = vmul.f32 %v252, %v276
      %v283 = vmul.f32 %v252, %v280
      %v284 = vadd.f32 %v247, %v281
      %v285 = vadd.f32 %v248, %v282
      %v286 = vadd.f32 %v249, %v283
      %287 = vset.pattern.permute.xlu0 2
      %288 = vperm.xlu0 %287, %v212
      %v289 = vpop.permute.xlu0 %288
      %v291 = vlaneseq
      %v292 = vshrl.u32 %v291, 7
      %v293 = vsub.s32 2, %v292
      %v294 = vrot.slane %v210, %v293
      %v295 = vlaneseq
      %v296 = vshrl.u32 %v295, 7
      %v297 = vsub.s32 6, %v296
      %v298 = vrot.slane %v210, %v297
      %v299 = vlaneseq
      %v300 = vshrl.u32 %v299, 7
      %v301 = vsub.s32 2, %v300
      %v302 = vrot.slane %v211, %v301
      %v306 = vlaneseq
      %v307 = vshrl.u32 %v306, 7
      %v308 = vsub.s32 2, %v307
      %v309 = vrot.slane %v294, %v308
      %v310 = vlaneseq
      %v311 = vshrl.u32 %v310, 7
      %v312 = vsub.s32 2, %v311
      %v313 = vrot.slane %v298, %v312
      %v314 = vlaneseq
      %v315 = vshrl.u32 %v314, 7
      %v316 = vsub.s32 2, %v315
      %v317 = vrot.slane %v302, %v316
      %v318 = vmul.f32 %v289, %v309
      %v319 = vmul.f32 %v289, %v313
      %v320 = vmul.f32 %v289, %v317
      %v321 = vadd.f32 %v284, %v318
      %v322 = vadd.f32 %v285, %v319
      %v323 = vadd.f32 %v286, %v320
      %v324 = vld [vmem:[%s2] sm:$0xff]
      %326 = vset.pattern.permute.xlu0 0
      %327 = vperm.xlu0 %326, %v324
      %v328 = vpop.permute.xlu0 %327
      %v330 = vadd.f32 %v321, %v328
      %v331 = vadd.f32 %v322, %v328
      %v332 = vadd.f32 %v323, %v328
      %v333 = vand.u32 2147483647, %v330
      %v334 = vand.u32 2147483647, %v331
      %v335 = vand.u32 2147483647, %v332
      %v336 = vmax.f32 %v333, 0.1
      %v337 = vmax.f32 %v334, 0.1
      %v338 = vmax.f32 %v335, 0.1
      %v339 = vmin.f32 %v336, 0.9
      %v340 = vmin.f32 %v337, 0.9
      %v341 = vmin.f32 %v338, 0.9
      %342 = vst [vmem:[%s208] sm:$0xff] %v339
      %343 = vst [vmem:[%s208 + $0x8] sm:$0xff] %v340
      %344 = vst [vmem:[%s208 + $0x10] sm:$0xff] %v341
      %s345 = smul.u32 3, %s19
      %p346 = scmp.lt.s32.totalorder %s18, 1
      %s347 = scalar_select %p346, %s18, 1
      %p348 = scmp.lt.s32.totalorder %s345, 2
      %s349 = scalar_select %p348, %s345, 2
      %s350 = smul.addr %s347, 3
      %s351 = sadd.s32 %s349, %s350
      %s352 = smul.addr %s351, 8
      %s353 = scalar_lea.vmem %s3, %s352
      // Predicated region
      $region33: #{model_forward.1} parent=31 // pred_check
        %p354 = pneg %p116
      $region34: #{model_forward.1} parent=31 // pred_check_branch
        %356 = sbr.rel (%p354) target = $region36
      $region35: #{model_forward.1} parent=31 // pred_region
        %s357 = smul.u32 3, %s19
      $region36: #{model_forward.1} parent=31 // pred_fallthru
        _
    $region32: #{model_forward.1} parent=5 // pred_fallthru
      _
    %p358 = scmp.le.s32.totalorder 2, %s9
    // Predicated region
    $region37: #{model_forward.1} parent=5 // pred_check
      %p359 = pneg %p358
    $region38: #{model_forward.1} parent=5 // pred_check_branch
      %361 = sbr.rel (%p359) target = $region40
    $region39: #{model_forward.1} parent=5 // pred_region
      %s362 = ssub.s32 %s9, 2
      // Predicated region
      $region41: #{model_forward.1} parent=39 // pred_check
        %p363 = pneg %p122
      $region42: #{model_forward.1} parent=39 // pred_check_branch
        %365 = sbr.rel (%p363) target = $region44
      $region43: #{model_forward.1} parent=39 // pred_region
        %s366 = smul.u32 3, %s21
        %p367 = scmp.lt.s32.totalorder %s20, 1
        %s368 = scalar_select %p367, %s20, 1
        %p369 = scmp.lt.s32.totalorder %s366, 2
        %s370 = scalar_select %p369, %s366, 2
        %s371 = smul.addr %s368, 3
        %s372 = sadd.s32 %s370, %s371
        %s373 = smul.addr %s372, 8
        %s374 = scalar_lea.vmem %s3, %s373
      $region44: #{model_forward.1} parent=39 // pred_fallthru
        _
    $region40: #{model_forward.1} parent=5 // pred_fallthru
      _
  $region6: #{model_forward.1} parent=0 // loop_footer
    %s13 = sadd.s32 1, %s9
  $region7: #{model_forward.1} parent=0 // loop_footer_branch
    %8 = sbr.rel target = $region3
  $region8: #{model_forward.1} parent=0 // loop_exit
    _

</llo_original>
